<compile_context>
chip_gen: v6e
topology: v6e:2x2x1
jax: 0.10.0
libtpu: 0.0.40
codegen_flags: <defaults>
</compile_context>

<pallas_src>
import math

import jax
import jax.numpy as jnp
from jax.experimental import pallas as pl
from jax.experimental.pallas import tpu as pltpu


def _round_up(n: int, m: int) -> int:
    return ((n + m - 1) // m) * m


# ---------------------------------------------------------------------------
# Kernel: pe[n, j] = sin(x[n] * (100 * div_term[j//2]) + phase[j])
#   where phase[j] = 0 for even j, pi/2 for odd j  (sin(t+pi/2) == cos(t)).
# ---------------------------------------------------------------------------
def pe_kernel(x_ref, tab_ref, o_ref):
    # x_ref:   (TILE_N, 1)      flattened input values for this row tile
    # tab_ref: (2, d_model)     row 0: per-lane frequency (100*div_term[j//2])
    #                           row 1: per-lane phase (0 / pi/2)
    # o_ref:   (TILE_N, d_model) interleaved sin/cos positional encoding
    ang = x_ref[...] * tab_ref[0:1, :] + tab_ref[1:2, :]   # (TILE_N, d_model)
    o_ref[...] = jnp.sin(ang)


# ---------------------------------------------------------------------------
# Buffer construction (matches the registered buffer in the PyTorch module)
# ---------------------------------------------------------------------------
def make_div_term(d_model: int) -> jnp.ndarray:
    # torch.exp(torch.arange(0, d_model, 2).float() * -(log(10000)/d_model))
    half = jnp.exp(
        jnp.arange(0, d_model, 2, dtype=jnp.float32)
        * (-(math.log(10000.0) / d_model))
    )
    return half.reshape(1, -1)                               # (1, d_model//2)


# ---------------------------------------------------------------------------
# Wrapper: lane-dense frequency/phase table, VMEM-aware tiling, padding
# ---------------------------------------------------------------------------
def positional_encoding_forward(x, div_term, d_model: int, *, tile_n: int = 1024):
    bs, lens, feat = x.shape
    n = bs * lens * feat
    x_flat = x.reshape(n, 1).astype(jnp.float32)

    # Per-output-lane frequency (div_term[j // 2]) with the *100 folded in, and
    # per-lane phase (0 on even lanes, pi/2 on odd lanes). Stacked so the kernel
    # receives a single (2, d_model) constant table.
    col = jnp.arange(d_model)
    div_full = div_term.reshape(-1)[col // 2].astype(jnp.float32) * 100.0
    phase = jnp.where((col % 2) == 1, jnp.float32(math.pi / 2.0), jnp.float32(0.0))
    tab = jnp.stack([div_full, phase], axis=0)               # (2, d_model)

    # VMEM-aware tile cap: double-buffered (tile, d_model) f32 output slab plus
    # the lane-padded (tile, 128) x block per buffer. 24 MiB budget is safe for
    # the default-scoped VMEM on v5e/v6e/v7x.
    vmem_budget = 24 * 1024 * 1024
    bytes_per_row = 2 * d_model * 4 + 2 * 128 * 4
    tile = min(tile_n, max(8, vmem_budget // bytes_per_row))
    tile = max(8, (tile // 8) * 8)

    # Guarantee >= 2 grid steps when possible so the "parallel" row axis shards
    # across both TensorCores on v7x (grid=(1,) would idle the second core).
    if n <= tile:
        tile = _round_up(max(pl.cdiv(n, 2), 8), 8)

    n_pad = _round_up(max(n, tile), tile)
    if n_pad != n:
        x_flat = jnp.pad(x_flat, ((0, n_pad - n), (0, 0)))

    grid = (n_pad // tile,)
    out = pl.pallas_call(
        pe_kernel,
        out_shape=jax.ShapeDtypeStruct((n_pad, d_model), jnp.float32),
        grid_spec=pltpu.PrefetchScalarGridSpec(
            num_scalar_prefetch=0,
            grid=grid,
            in_specs=[
                pl.BlockSpec((tile, 1), lambda i: (i, 0)),        # x rows (tiled)
                pl.BlockSpec((2, d_model), lambda i: (0, 0)),     # freq/phase table
            ],
            out_specs=pl.BlockSpec((tile, d_model), lambda i: (i, 0)),
        ),
        compiler_params=pltpu.CompilerParams(
            dimension_semantics=("parallel",)
        ),
    )(x_flat, tab)

    out = out[:n]
    # pe.view(bs, lens, -1): last dim is feat * d_model (feat == 1 for times).
    return out.reshape(bs, lens, feat * d_model)


# ---------------------------------------------------------------------------
# Pure-JAX reference (mirrors the PyTorch forward exactly)
# ---------------------------------------------------------------------------
def positional_encoding_ref(x, d_model: int):
    bs, lens, _ = x.shape
    xf = x.reshape(-1, 1).astype(jnp.float32) * 100.0
    half = jnp.exp(
        jnp.arange(0, d_model, 2, dtype=jnp.float32)
        * (-(math.log(10000.0) / d_model))
    ).reshape(1, -1)
    s = jnp.sin(xf * half)
    c = jnp.cos(xf * half)
    pe = jnp.zeros((xf.shape[0], d_model), jnp.float32)
    pe = pe.at[:, 0::2].set(s)
    pe = pe.at[:, 1::2].set(c)
    return pe.reshape(bs, lens, -1)


# ---------------------------------------------------------------------------
if __name__ == "__main__":
    # Small shapes consistent with the module: x is a (bs, lens, 1) time tensor.
    d_model = 128
    bs, lens = 2, 64

    key = jax.random.PRNGKey(0)
    x = jax.random.uniform(key, (bs, lens, 1), jnp.float32)

    div_term = make_div_term(d_model)          # the registered buffer

    pe = positional_encoding_forward(x, div_term, d_model)
    jax.block_until_ready(pe)

    # TODO(synk): Variable(..., requires_grad=False) has no Pallas analogue;
    # this is a pure inference forward (no autograd graph), which matches it.
    ref = positional_encoding_ref(x, d_model)

    assert pe.shape == (bs, lens, d_model), pe.shape
    assert bool(jnp.all(jnp.isfinite(pe)))
    # cos(t) is computed as sin(t + pi/2); small extra f32 deviation allowed.
    max_err = float(jnp.max(jnp.abs(pe - ref)))
    assert max_err < 2e-5, f"max abs err {max_err}"
    print("KERNEL_OK")
</pallas_src>

<mosaic_0001>
module attributes {stable_mosaic.version = 11 : i64} {
  func.func @pe_kernel(%arg0: i32, %arg1: memref<64x1xf32, #tpu.memory_space<vmem>>, %arg2: memref<2x128xf32, #tpu.memory_space<vmem>>, %arg3: memref<64x128xf32, #tpu.memory_space<vmem>>) attributes {dimension_semantics = [#tpu.dimension_semantics<parallel>], iteration_bounds = array<i64: 2>, scalar_prefetch = 0 : i64, scratch_operands = 0 : i64, tpu.core_type = #tpu.core_type<tc>, window_params = [{transform_indices = @transform_0, window_bounds = array<i64: 64, 1>}, {pipeline_mode = #tpu.pipeline_mode<synchronous>, transform_indices = @transform_1, window_bounds = array<i64: 2, 128>}, {transform_indices = @transform_2, window_bounds = array<i64: 64, 128>}]} {
    %c0 = arith.constant 0 : index
    %c0_0 = arith.constant 0 : index
    %0 = vector.load %arg1[%c0, %c0_0] : memref<64x1xf32, #tpu.memory_space<vmem>>, vector<64x1xf32>
    %c0_1 = arith.constant 0 : index
    %c0_2 = arith.constant 0 : index
    %1 = vector.load %arg2[%c0_1, %c0_2] : memref<2x128xf32, #tpu.memory_space<vmem>>, vector<1x128xf32>
    %2 = vector.broadcast %0 : vector<64x1xf32> to vector<64x128xf32>
    %3 = vector.broadcast %1 : vector<1x128xf32> to vector<64x128xf32>
    %4 = arith.mulf %2, %3 : vector<64x128xf32>
    %c1 = arith.constant 1 : index
    %c0_3 = arith.constant 0 : index
    %5 = vector.load %arg2[%c1, %c0_3] : memref<2x128xf32, #tpu.memory_space<vmem>>, vector<1x128xf32>
    %6 = vector.broadcast %5 : vector<1x128xf32> to vector<64x128xf32>
    %7 = arith.addf %4, %6 : vector<64x128xf32>
    %8 = math.sin %7 : vector<64x128xf32>
    %c0_4 = arith.constant 0 : index
    %c0_5 = arith.constant 0 : index
    %9 = vector.load %arg3[%c0_4, %c0_5] : memref<64x128xf32, #tpu.memory_space<vmem>>, vector<64x128xf32>
    tpu.vector_store %arg3[%c0_4, %c0_5], %8 {strides = array<i32>} : memref<64x128xf32, #tpu.memory_space<vmem>>, vector<64x128xf32>,
    return
  }
  func.func @transform_0(%arg0: i32) -> (i32, i32) {
    %c0_i32 = arith.constant 0 : i32
    %c0_i32_0 = arith.constant 0 : i32
    return %arg0, %c0_i32 : i32, i32
  }
  func.func @transform_1(%arg0: i32) -> (i32, i32) {
    %c0_i32 = arith.constant 0 : i32
    %c0_i32_0 = arith.constant 0 : i32
    %c0_i32_1 = arith.constant 0 : i32
    return %c0_i32, %c0_i32_0 : i32, i32
  }
  func.func @transform_2(%arg0: i32) -> (i32, i32) {
    %c0_i32 = arith.constant 0 : i32
    %c0_i32_0 = arith.constant 0 : i32
    return %arg0, %c0_i32 : i32, i32
  }
}

</mosaic_0001>

<llo_original>
// kernel: tpu_custom_call.1
$region0: #{tpu_custom_call.1}
  #allocation0 [shape = 'u32[]', space=smem, size = 0x4, offset = 0x4, fixed_abs, tag = 'smem constant byte address 0x4 - core index']
  #allocation1 [shape = 'u32[144,128]{1,0:T(1,128)}', space=vmem, size = 0x12000, scoped, tag = 'internal scratch']
  %s0 = inlined_call_operand.vmem [shape: f32[128,1], index: 0, kind: input, shape index: {}]
  %s1 = inlined_call_operand.vmem [shape: f32[2,128], index: 1, kind: input, shape index: {}]
  %s2 = inlined_call_operand.hbm [shape: f32[128,128], index: 2, kind: output, shape index: {}]
  %s3 = sld [smem:[#allocation0]]
  $region41: #{tpu_custom_call.1} parent=0
    _
  %s5 = ssub.s32 1, %s3
  %s6 = scalar_select 0, %s5, %s3
  $region1: #{tpu_custom_call.1} parent=0
    #allocation2 [shape = 'u8[65536]{0}', space=vmem, size = 0x10000, scoped, tag = 'output window, operand 0']
    #allocation3 [shape = 's32[2]{0}', space=sflag, size = 0x8, scoped, tag = 'scoped memory for tpu_custom_call.1']
    %7 = vsyncpa [#allocation3], 0
    %s8 = scalar_lea.sflag [#allocation3], 1
    %9 = vsyncpa %s8, 0
    loop: start=0, step=1, limit=4
    $region2: #{tpu_custom_call.1} parent=1 // loop_pre_header
      _
    $region3: #{tpu_custom_call.1} parent=1 // loop_header
      %s11 = sphi 0, %s15
      %p12 = scmp.ge.s32.totalorder %s11, 4
      %s21 = sphi 0, %s23
      %s24 = sphi 0, %s21
      %s25 = sphi 0, %s24
      %s41 = sphi 0, %s25
      %s45 = sphi 0, %s45
      %s47 = sphi 0, %s45
      %s48 = sphi 0, %s47
      %s62 = sphi 0, %s48
      %s68 = sphi 0, %s70
      %s71 = sphi 0, %s68
      %s72 = sphi 0, %s71
      %s88 = sphi 0, %s72
    $region4: #{tpu_custom_call.1} parent=1 // loop_header_branch
      %14 = sbr.rel (%p12) target = $region8
    $region5: #{tpu_custom_call.1} parent=1 // loop_body
      %s16 = ssub.s32 %s11, 1
      %s17 = ssub.s32 %s11, 2
      %s18 = sadd.s32 %s11, 1
      %s19 = ssub.s32 %s11, %s18
      %p20 = scmp.eq.s32.totalorder %s19, 0
      %s22 = sadd.s32 %s21, 1
      %s23 = scalar_select %p20, %s21, %s22
      %p26 = pneg %p20
      %p27 = scmp.eq.s32.totalorder %s11, 1
      %p28 = por %p26, %p27
      %p29 = scmp.ne.s32.totalorder %s21, %s24
      %p30 = scmp.eq.s32.totalorder %s11, 0
      %p31 = por %p29, %p30
      %p32 = scmp.ne.s32.totalorder %s21, %s24
      %p33 = scmp.eq.s32.totalorder %s16, 1
      %p34 = por %p32, %p33
      %p35 = scmp.ne.s32.totalorder %s24, %s25
      %p36 = scmp.eq.s32.totalorder %s16, 0
      %p37 = por %p35, %p36
      %p38 = scmp.ne.s32.totalorder %s24, %s25
      %p39 = scmp.eq.s32.totalorder %s17, 1
      %p40 = por %p38, %p39
      %p42 = scmp.ne.s32.totalorder %s25, %s41
      %p43 = scmp.eq.s32.totalorder %s17, 0
      %p44 = por %p42, %p43
      %s46 = sadd.s32 %s45, 1
      %p49 = scmp.eq.s32.totalorder %s11, 1
      %p50 = scmp.ne.s32.totalorder %s45, %s47
      %p51 = scmp.eq.s32.totalorder %s11, 0
      %p52 = por %p50, %p51
      %p53 = scmp.ne.s32.totalorder %s45, %s47
      %p54 = scmp.eq.s32.totalorder %s16, 1
      %p55 = por %p53, %p54
      %p56 = scmp.ne.s32.totalorder %s47, %s48
      %p57 = scmp.eq.s32.totalorder %s16, 0
      %p58 = por %p56, %p57
      %p59 = scmp.ne.s32.totalorder %s47, %s48
      %p60 = scmp.eq.s32.totalorder %s17, 1
      %p61 = por %p59, %p60
      %p63 = scmp.ne.s32.totalorder %s48, %s62
      %p64 = scmp.eq.s32.totalorder %s17, 0
      %p65 = por %p63, %p64
      %s66 = ssub.s32 %s11, %s18
      %p67 = scmp.eq.s32.totalorder %s66, 0
      %s69 = sadd.s32 %s68, 1
      %s70 = scalar_select %p67, %s68, %s69
      %p73 = pneg %p67
      %p74 = scmp.eq.s32.totalorder %s11, 1
      %p75 = por %p73, %p74
      %p76 = scmp.ne.s32.totalorder %s68, %s71
      %p77 = scmp.eq.s32.totalorder %s11, 0
      %p78 = por %p76, %p77
      %p79 = scmp.ne.s32.totalorder %s68, %s71
      %p80 = scmp.eq.s32.totalorder %s16, 1
      %p81 = por %p79, %p80
      %p82 = scmp.ne.s32.totalorder %s71, %s72
      %p83 = scmp.eq.s32.totalorder %s16, 0
      %p84 = por %p82, %p83
      %p85 = scmp.ne.s32.totalorder %s71, %s72
      %p86 = scmp.eq.s32.totalorder %s17, 1
      %p87 = por %p85, %p86
      %p89 = scmp.ne.s32.totalorder %s72, %s88
      %p90 = scmp.eq.s32.totalorder %s17, 0
      %p91 = por %p89, %p90
      %p92 = scmp.le.s32.totalorder 1, %s11
      %p93 = scmp.lt.s32.totalorder %s11, 3
      %p94 = pnand %p92, %p93
      %p95 = pneg %p94
      // Predicated region
      $region9: #{tpu_custom_call.1} parent=5 // pred_check
        _
      $region10: #{tpu_custom_call.1} parent=5 // pred_check_branch
        %97 = sbr.rel (%p94) target = $region12
      $region11: #{tpu_custom_call.1} parent=5 // pred_region
        %s98 = ssub.s32 %s11, 1
        // Predicated region
        $region13: #{tpu_custom_call.1} parent=11 // pred_check
          %p99 = pneg %p58
        $region14: #{tpu_custom_call.1} parent=11 // pred_check_branch
          %101 = sbr.rel (%p99) target = $region16
        $region15: #{tpu_custom_call.1} parent=11 // pred_region
          _
        $region16: #{tpu_custom_call.1} parent=11 // pred_fallthru
          _
      $region12: #{tpu_custom_call.1} parent=5 // pred_fallthru
        _
      %p102 = scmp.lt.s32.totalorder %s11, 2
      // Predicated region
      $region17: #{tpu_custom_call.1} parent=5 // pred_check
        %p103 = pneg %p102
      $region18: #{tpu_custom_call.1} parent=5 // pred_check_branch
        %105 = sbr.rel (%p103) target = $region20
      $region19: #{tpu_custom_call.1} parent=5 // pred_region
        // Predicated region
        $region21: #{tpu_custom_call.1} parent=19 // pred_check
          %p106 = pneg %p31
        $region22: #{tpu_custom_call.1} parent=19 // pred_check_branch
          %108 = sbr.rel (%p106) target = $region24
        $region23: #{tpu_custom_call.1} parent=19 // pred_region
          %s109 = smul.u32 8, %s11
          %p110 = scmp.lt.s32.totalorder %s109, 15
          %s111 = scalar_select %p110, %s109, 15
          %s112 = smul.addr %s111, 8
          %s113 = scalar_lea.vmem %s0, %s112
          %s114 = smul.u32 8, %s11
        $region24: #{tpu_custom_call.1} parent=19 // pred_fallthru
          _
      $region20: #{tpu_custom_call.1} parent=5 // pred_fallthru
        _
      %p115 = scmp.le.s32.totalorder 1, %s11
      %p116 = scmp.lt.s32.totalorder %s11, 3
      %p117 = pnand %p115, %p116
      %p118 = pneg %p117
      // Predicated region
      $region25: #{tpu_custom_call.1} parent=5 // pred_check
        _
      $region26: #{tpu_custom_call.1} parent=5 // pred_check_branch
        %120 = sbr.rel (%p117) target = $region28
      $region27: #{tpu_custom_call.1} parent=5 // pred_region
        %s121 = ssub.s32 %s11, 1
        %s122 = smul.u32 8, %s16
        %p123 = scmp.lt.s32.totalorder %s122, 15
        %s124 = scalar_select %p123, %s122, 15
        %s125 = smul.addr %s124, 8
        %s126 = scalar_lea.vmem %s0, %s125
        %p127 = pneg %p37
        %p128 = pneg %p34
        %p129 = pneg %p58
        %p130 = pneg %p55
        %p131 = pneg %p84
        %p132 = pneg %p81
        %s133 = sand.u32 %s71, 1
        %s134 = scalar_lea.sflag [#allocation3], %s133
        %s135 = sand.u32 %s71, 1
        %s136 = smul.addr %s135, 64
        %s137 = scalar_lea.vmem [#allocation2], %s136
        %s138 = smul.u32 8, %s16
        %p139 = scmp.lt.s32.totalorder %s138, 15
        %s140 = scalar_select %p139, %s138, 15
        %s141 = smul.addr %s140, 8
        %s142 = scalar_lea.vmem %s0, %s141
        %s143 = smul.u32 8, %s16
        %s144 = smul.u32 8, %s16
        %v145 = vld [vmem:[%s142] sm:$0xff]
        %v146 = vld [vmem:[%s142 + $0x8] sm:$0xff]
        %v147 = vld [vmem:[%s142 + $0x10] sm:$0xff]
        %v148 = vld [vmem:[%s142 + $0x18] sm:$0xff]
        %v149 = vld [vmem:[%s142 + $0x20] sm:$0xff]
        %v150 = vld [vmem:[%s142 + $0x28] sm:$0xff]
        %v151 = vld [vmem:[%s142 + $0x30] sm:$0xff]
        %v152 = vld [vmem:[%s142 + $0x38] sm:$0xff]
        %v153 = vld [vmem:[%s1] sm:$0x1]
        %155 = vset.pattern.permute.xlu0 0
        %156 = vperm.xlu0 %155, %v145
        %v157 = vpop.permute.xlu0 %156
        %160 = vset.pattern.permute.xlu0 0
        %161 = vperm.xlu0 %160, %v146
        %v162 = vpop.permute.xlu0 %161
        %165 = vset.pattern.permute.xlu0 0
        %166 = vperm.xlu0 %165, %v147
        %v167 = vpop.permute.xlu0 %166
        %170 = vset.pattern.permute.xlu0 0
        %171 = vperm.xlu0 %170, %v148
        %v172 = vpop.permute.xlu0 %171
        %175 = vset.pattern.permute.xlu0 0
        %176 = vperm.xlu0 %175, %v149
        %v177 = vpop.permute.xlu0 %176
        %180 = vset.pattern.permute.xlu0 0
        %181 = vperm.xlu0 %180, %v150
        %v182 = vpop.permute.xlu0 %181
        %185 = vset.pattern.permute.xlu0 0
        %186 = vperm.xlu0 %185, %v151
        %v187 = vpop.permute.xlu0 %186
        %190 = vset.pattern.permute.xlu0 0
        %191 = vperm.xlu0 %190, %v152
        %v192 = vpop.permute.xlu0 %191
        %v194 = vlaneseq
        %v195 = vshrl.u32 %v194, 7
        %v196 = vsub.s32 0, %v195
        %v197 = vrot.slane %v153, %v196
        %v198 = vmul.f32 %v157, %v197
        %v199 = vmul.f32 %v162, %v197
        %v200 = vmul.f32 %v167, %v197
        %v201 = vmul.f32 %v172, %v197
        %v202 = vmul.f32 %v177, %v197
        %v203 = vmul.f32 %v182, %v197
        %v204 = vmul.f32 %v187, %v197
        %v205 = vmul.f32 %v192, %v197
        %v206 = vld [vmem:[%s1 + $0x1] sm:$0x1]
        %v207 = vlaneseq
        %v208 = vshrl.u32 %v207, 7
        %v209 = vsub.s32 0, %v208
        %v210 = vrot.slane %v206, %v209
        %v211 = vadd.f32 %v198, %v210
        %v212 = vadd.f32 %v199, %v210
        %v213 = vadd.f32 %v200, %v210
        %v214 = vadd.f32 %v201, %v210
        %v215 = vadd.f32 %v202, %v210
        %v216 = vadd.f32 %v203, %v210
        %v217 = vadd.f32 %v204, %v210
        %v218 = vadd.f32 %v205, %v210
        %v219 = vand.u32 2147483647, %v211
        %vm220 = vcmp.le.f32.partialorder %v219, 0.7853982
        %vm221 = vcmp.lt.s32.totalorder %v211, 0
        %v222 = vand.u32 %v211, 2139095040
        %v223 = vshrl.u32 %v222, 23
        %v224 = vsub.s32 %v223, 127
        %v225 = vand.u32 2147483647, %v211
        %v226 = vand.u32 %v225, 8388607
        %v227 = vor.u32 %v226, 8388608
        %v228 = vsub.s32 0, %v227
        %v229 = vadd.s32 %v224, 1
        %vm230 = vcmp.gt.s32.totalorder %v229, 0
        %v231 = vsel %vm230, %v229, 0
        %v232 = vshrl.u32 %v231, 5
        %v233 = vand.u32 %v231, 31
        %v234 = vsub.s32 32, %v233
        %v235 = vshrl.u32 683565275, %v234
        %v236 = vshll.u32 683565275, %v233
        %v237 = vshrl.u32 2475754826, %v234
        %v238 = vor.u32 %v236, %v237
        %v239 = vshll.u32 2475754826, %v233
        %v240 = vshrl.u32 2131351028, %v234
        %v241 = vor.u32 %v239, %v240
        %v242 = vshll.u32 2131351028, %v233
        %v243 = vshrl.u32 2102212464, %v234
        %v244 = vor.u32 %v242, %v243
        %v245 = vshll.u32 2102212464, %v233
        %v246 = vshrl.u32 920167782, %v234
        %v247 = vor.u32 %v245, %v246
        %v248 = vshll.u32 920167782, %v233
        %v249 = vshrl.u32 1326507024, %v234
        %v250 = vor.u32 %v248, %v249
        %vm251 = vcmp.lt.s32.totalorder %v232, 1
        %vm252 = vcmp.lt.s32.totalorder %v232, 2
        %vm253 = vcmp.lt.s32.totalorder %v232, 3
        %vm254 = vcmp.lt.s32.totalorder %v232, 4
        %v255 = vsel %vm251, %v235, %v238
        %v256 = vsel %vm254, %v244, 2102212464
        %v257 = vsel %vm253, %v241, %v256
        %v258 = vsel %vm252, %v255, %v257
        %v259 = vsel %vm251, %v238, %v241
        %v260 = vsel %vm254, %v247, 920167782
        %v261 = vsel %vm253, %v244, %v260
        %v262 = vsel %vm252, %v259, %v261
        %v263 = vsel %vm251, %v241, %v244
        %v264 = vsel %vm254, %v250, 1326507024
        %v265 = vsel %vm253, %v247, %v264
        %v266 = vsel %vm252, %v263, %v265
        %v267 = vshll.u32 %v227, 8
        %v268 = vmul.u32.u64.compose %v267, %v266
        %v269 = vextract.low.u32 %v268
        %v270 = vextract.high.u32 %v268
        %v271 = vmul.u32.u64.compose %v267, %v262
        %v272 = vextract.low.u32 %v271
        %v273 = vextract.high.u32 %v271
        %v274 = vmul.u32 %v267, %v258
        %v275 = vadd.s32 %v270, %v272
        %vm276 = vc.u32 %v270, %v272
        %v277 = vadd.s32 %v273, 1
        %v278 = vsel %vm276, %v277, %v273
        %v279 = vadd.s32 %v274, %v278
        %v280 = vadd.s32 %v279, 536870912
        %v281 = vshrl.u32 %v280, 30
        %v282 = vshll.u32 %v281, 30
        %v283 = vsub.s32 %v279, %v282
        %vm284 = vcmp.lt.s32.totalorder %v283, 0
        %v285 = vsub.s32 0, %v283
        %v286 = vsel %vm284, %v285, %v283
        %v287 = vclz %v286
        %v288 = vsub.s32 %v287, 2
        %vm289 = vcmp.gt.s32.totalorder 0, %v288
        %v290 = vsel %vm289, 0, %v288
        %v291 = vsub.s32 32, %v290
        %v292 = vshll.u32 %v283, %v290
        %v293 = vshrl.u32 %v275, %v291
        %v294 = vor.u32 %v292, %v293
        %v295 = vsub.s32 4294967266, %v290
        %v296 = vadd.s32 %v295, 127
        %v297 = vshll.u32 %v296, 23
        %v298 = vor.u32 4788187, %v297
        %v299 = vand.u32 2147483647, %v298
        %v301 = vcvt.s32.f32 %v294
        %v302 = vmul.f32 %v301, %v299
        %v303 = vxor.u32 %v302, 2147483648
        %v304 = vsel %vm221, %v303, %v302
        %v305 = vsub.s32 4, %v281
        %v306 = vsel %vm221, %v305, %v281
        %v307 = vsel %vm220, %v211, %v304
        %v308 = vsel %vm220, 0, %v306
        %v309 = vcosq.f32.pop %v307
        %v310 = vsinq.f32.pop %v307
        %vm311 = vweird.f32 %v211
        %v312 = vadd.s32 %v308, 3
        %v313 = vand.u32 %v312, 3
        %vm314 = vcmp.lt.s32.totalorder %v313, 2
        %vm315 = vcmp.eq.s32.totalorder %v313, 0
        %v316 = vxor.u32 %v310, 2147483648
        %v317 = vsel %vm315, %v309, %v316
        %vm318 = vcmp.eq.s32.totalorder %v313, 2
        %v319 = vxor.u32 %v309, 2147483648
        %v320 = vsel %vm318, %v319, %v310
        %v321 = vsel %vm314, %v317, %v320
        %v322 = vsel %vm311, nan, %v321
        %v323 = vand.u32 2147483647, %v212
        %vm324 = vcmp.le.f32.partialorder %v323, 0.7853982
        %vm325 = vcmp.lt.s32.totalorder %v212, 0
        %v326 = vand.u32 %v212, 2139095040
        %v327 = vshrl.u32 %v326, 23
        %v328 = vsub.s32 %v327, 127
        %v329 = vand.u32 2147483647, %v212
        %v330 = vand.u32 %v329, 8388607
        %v331 = vor.u32 %v330, 8388608
        %v332 = vsub.s32 0, %v331
        %v333 = vadd.s32 %v328, 1
        %vm334 = vcmp.gt.s32.totalorder %v333, 0
        %v335 = vsel %vm334, %v333, 0
        %v336 = vshrl.u32 %v335, 5
        %v337 = vand.u32 %v335, 31
        %v338 = vsub.s32 32, %v337
        %v339 = vshrl.u32 683565275, %v338
        %v340 = vshll.u32 683565275, %v337
        %v341 = vshrl.u32 2475754826, %v338
        %v342 = vor.u32 %v340, %v341
        %v343 = vshll.u32 2475754826, %v337
        %v344 = vshrl.u32 2131351028, %v338
        %v345 = vor.u32 %v343, %v344
        %v346 = vshll.u32 2131351028, %v337
        %v347 = vshrl.u32 2102212464, %v338
        %v348 = vor.u32 %v346, %v347
        %v349 = vshll.u32 2102212464, %v337
        %v350 = vshrl.u32 920167782, %v338
        %v351 = vor.u32 %v349, %v350
        %v352 = vshll.u32 920167782, %v337
        %v353 = vshrl.u32 1326507024, %v338
        %v354 = vor.u32 %v352, %v353
        %vm355 = vcmp.lt.s32.totalorder %v336, 1
        %vm356 = vcmp.lt.s32.totalorder %v336, 2
        %vm357 = vcmp.lt.s32.totalorder %v336, 3
        %vm358 = vcmp.lt.s32.totalorder %v336, 4
        %v359 = vsel %vm355, %v339, %v342
        %v360 = vsel %vm358, %v348, 2102212464
        %v361 = vsel %vm357, %v345, %v360
        %v362 = vsel %vm356, %v359, %v361
        %v363 = vsel %vm355, %v342, %v345
        %v364 = vsel %vm358, %v351, 920167782
        %v365 = vsel %vm357, %v348, %v364
        %v366 = vsel %vm356, %v363, %v365
        %v367 = vsel %vm355, %v345, %v348
        %v368 = vsel %vm358, %v354, 1326507024
        %v369 = vsel %vm357, %v351, %v368
        %v370 = vsel %vm356, %v367, %v369
        %v371 = vshll.u32 %v331, 8
        %v372 = vmul.u32.u64.compose %v371, %v370
        %v373 = vextract.low.u32 %v372
        %v374 = vextract.high.u32 %v372
        %v375 = vmul.u32.u64.compose %v371, %v366
        %v376 = vextract.low.u32 %v375
        %v377 = vextract.high.u32 %v375
        %v378 = vmul.u32 %v371, %v362
        %v379 = vadd.s32 %v374, %v376
        %vm380 = vc.u32 %v374, %v376
        %v381 = vadd.s32 %v377, 1
        %v382 = vsel %vm380, %v381, %v377
        %v383 = vadd.s32 %v378, %v382
        %v384 = vadd.s32 %v383, 536870912
        %v385 = vshrl.u32 %v384, 30
        %v386 = vshll.u32 %v385, 30
        %v387 = vsub.s32 %v383, %v386
        %vm388 = vcmp.lt.s32.totalorder %v387, 0
        %v389 = vsub.s32 0, %v387
        %v390 = vsel %vm388, %v389, %v387
        %v391 = vclz %v390
        %v392 = vsub.s32 %v391, 2
        %vm393 = vcmp.gt.s32.totalorder 0, %v392
        %v394 = vsel %vm393, 0, %v392
        %v395 = vsub.s32 32, %v394
        %v396 = vshll.u32 %v387, %v394
        %v397 = vshrl.u32 %v379, %v395
        %v398 = vor.u32 %v396, %v397
        %v399 = vsub.s32 4294967266, %v394
        %v400 = vadd.s32 %v399, 127
        %v401 = vshll.u32 %v400, 23
        %v402 = vor.u32 4788187, %v401
        %v403 = vand.u32 2147483647, %v402
        %v405 = vcvt.s32.f32 %v398
        %v406 = vmul.f32 %v405, %v403
        %v407 = vxor.u32 %v406, 2147483648
        %v408 = vsel %vm325, %v407, %v406
        %v409 = vsub.s32 4, %v385
        %v410 = vsel %vm325, %v409, %v385
        %v411 = vsel %vm324, %v212, %v408
        %v412 = vsel %vm324, 0, %v410
        %v413 = vcosq.f32.pop %v411
        %v414 = vsinq.f32.pop %v411
        %vm415 = vweird.f32 %v212
        %v416 = vadd.s32 %v412, 3
        %v417 = vand.u32 %v416, 3
        %vm418 = vcmp.lt.s32.totalorder %v417, 2
        %vm419 = vcmp.eq.s32.totalorder %v417, 0
        %v420 = vxor.u32 %v414, 2147483648
        %v421 = vsel %vm419, %v413, %v420
        %vm422 = vcmp.eq.s32.totalorder %v417, 2
        %v423 = vxor.u32 %v413, 2147483648
        %v424 = vsel %vm422, %v423, %v414
        %v425 = vsel %vm418, %v421, %v424
        %v426 = vsel %vm415, nan, %v425
        %v427 = vand.u32 2147483647, %v213
        %vm428 = vcmp.le.f32.partialorder %v427, 0.7853982
        %vm429 = vcmp.lt.s32.totalorder %v213, 0
        %v430 = vand.u32 %v213, 2139095040
        %v431 = vshrl.u32 %v430, 23
        %v432 = vsub.s32 %v431, 127
        %v433 = vand.u32 2147483647, %v213
        %v434 = vand.u32 %v433, 8388607
        %v435 = vor.u32 %v434, 8388608
        %v436 = vsub.s32 0, %v435
        %v437 = vadd.s32 %v432, 1
        %vm438 = vcmp.gt.s32.totalorder %v437, 0
        %v439 = vsel %vm438, %v437, 0
        %v440 = vshrl.u32 %v439, 5
        %v441 = vand.u32 %v439, 31
        %v442 = vsub.s32 32, %v441
        %v443 = vshrl.u32 683565275, %v442
        %v444 = vshll.u32 683565275, %v441
        %v445 = vshrl.u32 2475754826, %v442
        %v446 = vor.u32 %v444, %v445
        %v447 = vshll.u32 2475754826, %v441
        %v448 = vshrl.u32 2131351028, %v442
        %v449 = vor.u32 %v447, %v448
        %v450 = vshll.u32 2131351028, %v441
        %v451 = vshrl.u32 2102212464, %v442
        %v452 = vor.u32 %v450, %v451
        %v453 = vshll.u32 2102212464, %v441
        %v454 = vshrl.u32 920167782, %v442
        %v455 = vor.u32 %v453, %v454
        %v456 = vshll.u32 920167782, %v441
        %v457 = vshrl.u32 1326507024, %v442
        %v458 = vor.u32 %v456, %v457
        %vm459 = vcmp.lt.s32.totalorder %v440, 1
        %vm460 = vcmp.lt.s32.totalorder %v440, 2
        %vm461 = vcmp.lt.s32.totalorder %v440, 3
        %vm462 = vcmp.lt.s32.totalorder %v440, 4
        %v463 = vsel %vm459, %v443, %v446
        %v464 = vsel %vm462, %v452, 2102212464
        %v465 = vsel %vm461, %v449, %v464
        %v466 = vsel %vm460, %v463, %v465
        %v467 = vsel %vm459, %v446, %v449
        %v468 = vsel %vm462, %v455, 920167782
        %v469 = vsel %vm461, %v452, %v468
        %v470 = vsel %vm460, %v467, %v469
        %v471 = vsel %vm459, %v449, %v452
        %v472 = vsel %vm462, %v458, 1326507024
        %v473 = vsel %vm461, %v455, %v472
        %v474 = vsel %vm460, %v471, %v473
        %v475 = vshll.u32 %v435, 8
        %v476 = vmul.u32.u64.compose %v475, %v474
        %v477 = vextract.low.u32 %v476
        %v478 = vextract.high.u32 %v476
        %v479 = vmul.u32.u64.compose %v475, %v470
        %v480 = vextract.low.u32 %v479
        %v481 = vextract.high.u32 %v479
        %v482 = vmul.u32 %v475, %v466
        %v483 = vadd.s32 %v478, %v480
        %vm484 = vc.u32 %v478, %v480
        %v485 = vadd.s32 %v481, 1
        %v486 = vsel %vm484, %v485, %v481
        %v487 = vadd.s32 %v482, %v486
        %v488 = vadd.s32 %v487, 536870912
        %v489 = vshrl.u32 %v488, 30
        %v490 = vshll.u32 %v489, 30
        %v491 = vsub.s32 %v487, %v490
        %vm492 = vcmp.lt.s32.totalorder %v491, 0
        %v493 = vsub.s32 0, %v491
        %v494 = vsel %vm492, %v493, %v491
        %v495 = vclz %v494
        %v496 = vsub.s32 %v495, 2
        %vm497 = vcmp.gt.s32.totalorder 0, %v496
        %v498 = vsel %vm497, 0, %v496
        %v499 = vsub.s32 32, %v498
        %v500 = vshll.u32 %v491, %v498
        %v501 = vshrl.u32 %v483, %v499
        %v502 = vor.u32 %v500, %v501
        %v503 = vsub.s32 4294967266, %v498
        %v504 = vadd.s32 %v503, 127
        %v505 = vshll.u32 %v504, 23
        %v506 = vor.u32 4788187, %v505
        %v507 = vand.u32 2147483647, %v506
        %v509 = vcvt.s32.f32 %v502
        %v510 = vmul.f32 %v509, %v507
        %v511 = vxor.u32 %v510, 2147483648
        %v512 = vsel %vm429, %v511, %v510
        %v513 = vsub.s32 4, %v489
        %v514 = vsel %vm429, %v513, %v489
        %v515 = vsel %vm428, %v213, %v512
        %v516 = vsel %vm428, 0, %v514
        %v517 = vcosq.f32.pop %v515
        %v518 = vsinq.f32.pop %v515
        %vm519 = vweird.f32 %v213
        %v520 = vadd.s32 %v516, 3
        %v521 = vand.u32 %v520, 3
        %vm522 = vcmp.lt.s32.totalorder %v521, 2
        %vm523 = vcmp.eq.s32.totalorder %v521, 0
        %v524 = vxor.u32 %v518, 2147483648
        %v525 = vsel %vm523, %v517, %v524
        %vm526 = vcmp.eq.s32.totalorder %v521, 2
        %v527 = vxor.u32 %v517, 2147483648
        %v528 = vsel %vm526, %v527, %v518
        %v529 = vsel %vm522, %v525, %v528
        %v530 = vsel %vm519, nan, %v529
        %v531 = vand.u32 2147483647, %v214
        %vm532 = vcmp.le.f32.partialorder %v531, 0.7853982
        %vm533 = vcmp.lt.s32.totalorder %v214, 0
        %v534 = vand.u32 %v214, 2139095040
        %v535 = vshrl.u32 %v534, 23
        %v536 = vsub.s32 %v535, 127
        %v537 = vand.u32 2147483647, %v214
        %v538 = vand.u32 %v537, 8388607
        %v539 = vor.u32 %v538, 8388608
        %v540 = vsub.s32 0, %v539
        %v541 = vadd.s32 %v536, 1
        %vm542 = vcmp.gt.s32.totalorder %v541, 0
        %v543 = vsel %vm542, %v541, 0
        %v544 = vshrl.u32 %v543, 5
        %v545 = vand.u32 %v543, 31
        %v546 = vsub.s32 32, %v545
        %v547 = vshrl.u32 683565275, %v546
        %v548 = vshll.u32 683565275, %v545
        %v549 = vshrl.u32 2475754826, %v546
        %v550 = vor.u32 %v548, %v549
        %v551 = vshll.u32 2475754826, %v545
        %v552 = vshrl.u32 2131351028, %v546
        %v553 = vor.u32 %v551, %v552
        %v554 = vshll.u32 2131351028, %v545
        %v555 = vshrl.u32 2102212464, %v546
        %v556 = vor.u32 %v554, %v555
        %v557 = vshll.u32 2102212464, %v545
        %v558 = vshrl.u32 920167782, %v546
        %v559 = vor.u32 %v557, %v558
        %v560 = vshll.u32 920167782, %v545
        %v561 = vshrl.u32 1326507024, %v546
        %v562 = vor.u32 %v560, %v561
        %vm563 = vcmp.lt.s32.totalorder %v544, 1
        %vm564 = vcmp.lt.s32.totalorder %v544, 2
        %vm565 = vcmp.lt.s32.totalorder %v544, 3
        %vm566 = vcmp.lt.s32.totalorder %v544, 4
        %v567 = vsel %vm563, %v547, %v550
        %v568 = vsel %vm566, %v556, 2102212464
        %v569 = vsel %vm565, %v553, %v568
        %v570 = vsel %vm564, %v567, %v569
        %v571 = vsel %vm563, %v550, %v553
        %v572 = vsel %vm566, %v559, 920167782
        %v573 = vsel %vm565, %v556, %v572
        %v574 = vsel %vm564, %v571, %v573
        %v575 = vsel %vm563, %v553, %v556
        %v576 = vsel %vm566, %v562, 1326507024
        %v577 = vsel %vm565, %v559, %v576
        %v578 = vsel %vm564, %v575, %v577
        %v579 = vshll.u32 %v539, 8
        %v580 = vmul.u32.u64.compose %v579, %v578
        %v581 = vextract.low.u32 %v580
        %v582 = vextract.high.u32 %v580
        %v583 = vmul.u32.u64.compose %v579, %v574
        %v584 = vextract.low.u32 %v583
        %v585 = vextract.high.u32 %v583
        %v586 = vmul.u32 %v579, %v570
        %v587 = vadd.s32 %v582, %v584
        %vm588 = vc.u32 %v582, %v584
        %v589 = vadd.s32 %v585, 1
        %v590 = vsel %vm588, %v589, %v585
        %v591 = vadd.s32 %v586, %v590
        %v592 = vadd.s32 %v591, 536870912
        %v593 = vshrl.u32 %v592, 30
        %v594 = vshll.u32 %v593, 30
        %v595 = vsub.s32 %v591, %v594
        %vm596 = vcmp.lt.s32.totalorder %v595, 0
        %v597 = vsub.s32 0, %v595
        %v598 = vsel %vm596, %v597, %v595
        %v599 = vclz %v598
        %v600 = vsub.s32 %v599, 2
        %vm601 = vcmp.gt.s32.totalorder 0, %v600
        %v602 = vsel %vm601, 0, %v600
        %v603 = vsub.s32 32, %v602
        %v604 = vshll.u32 %v595, %v602
        %v605 = vshrl.u32 %v587, %v603
        %v606 = vor.u32 %v604, %v605
        %v607 = vsub.s32 4294967266, %v602
        %v608 = vadd.s32 %v607, 127
        %v609 = vshll.u32 %v608, 23
        %v610 = vor.u32 4788187, %v609
        %v611 = vand.u32 2147483647, %v610
        %v613 = vcvt.s32.f32 %v606
        %v614 = vmul.f32 %v613, %v611
        %v615 = vxor.u32 %v614, 2147483648
        %v616 = vsel %vm533, %v615, %v614
        %v617 = vsub.s32 4, %v593
        %v618 = vsel %vm533, %v617, %v593
        %v619 = vsel %vm532, %v214, %v616
        %v620 = vsel %vm532, 0, %v618
        %v621 = vcosq.f32.pop %v619
        %v622 = vsinq.f32.pop %v619
        %vm623 = vweird.f32 %v214
        %v624 = vadd.s32 %v620, 3
        %v625 = vand.u32 %v624, 3
        %vm626 = vcmp.lt.s32.totalorder %v625, 2
        %vm627 = vcmp.eq.s32.totalorder %v625, 0
        %v628 = vxor.u32 %v622, 2147483648
        %v629 = vsel %vm627, %v621, %v628
        %vm630 = vcmp.eq.s32.totalorder %v625, 2
        %v631 = vxor.u32 %v621, 2147483648
        %v632 = vsel %vm630, %v631, %v622
        %v633 = vsel %vm626, %v629, %v632
        %v634 = vsel %vm623, nan, %v633
        %v635 = vand.u32 2147483647, %v215
        %vm636 = vcmp.le.f32.partialorder %v635, 0.7853982
        %vm637 = vcmp.lt.s32.totalorder %v215, 0
        %v638 = vand.u32 %v215, 2139095040
        %v639 = vshrl.u32 %v638, 23
        %v640 = vsub.s32 %v639, 127
        %v641 = vand.u32 2147483647, %v215
        %v642 = vand.u32 %v641, 8388607
        %v643 = vor.u32 %v642, 8388608
        %v644 = vsub.s32 0, %v643
        %v645 = vadd.s32 %v640, 1
        %vm646 = vcmp.gt.s32.totalorder %v645, 0
        %v647 = vsel %vm646, %v645, 0
        %v648 = vshrl.u32 %v647, 5
        %v649 = vand.u32 %v647, 31
        %v650 = vsub.s32 32, %v649
        %v651 = vshrl.u32 683565275, %v650
        %v652 = vshll.u32 683565275, %v649
        %v653 = vshrl.u32 2475754826, %v650
        %v654 = vor.u32 %v652, %v653
        %v655 = vshll.u32 2475754826, %v649
        %v656 = vshrl.u32 2131351028, %v650
        %v657 = vor.u32 %v655, %v656
        %v658 = vshll.u32 2131351028, %v649
        %v659 = vshrl.u32 2102212464, %v650
        %v660 = vor.u32 %v658, %v659
        %v661 = vshll.u32 2102212464, %v649
        %v662 = vshrl.u32 920167782, %v650
        %v663 = vor.u32 %v661, %v662
        %v664 = vshll.u32 920167782, %v649
        %v665 = vshrl.u32 1326507024, %v650
        %v666 = vor.u32 %v664, %v665
        %vm667 = vcmp.lt.s32.totalorder %v648, 1
        %vm668 = vcmp.lt.s32.totalorder %v648, 2
        %vm669 = vcmp.lt.s32.totalorder %v648, 3
        %vm670 = vcmp.lt.s32.totalorder %v648, 4
        %v671 = vsel %vm667, %v651, %v654
        %v672 = vsel %vm670, %v660, 2102212464
        %v673 = vsel %vm669, %v657, %v672
        %v674 = vsel %vm668, %v671, %v673
        %v675 = vsel %vm667, %v654, %v657
        %v676 = vsel %vm670, %v663, 920167782
        %v677 = vsel %vm669, %v660, %v676
        %v678 = vsel %vm668, %v675, %v677
        %v679 = vsel %vm667, %v657, %v660
        %v680 = vsel %vm670, %v666, 1326507024
        %v681 = vsel %vm669, %v663, %v680
        %v682 = vsel %vm668, %v679, %v681
        %v683 = vshll.u32 %v643, 8
        %v684 = vmul.u32.u64.compose %v683, %v682
        %v685 = vextract.low.u32 %v684
        %v686 = vextract.high.u32 %v684
        %v687 = vmul.u32.u64.compose %v683, %v678
        %v688 = vextract.low.u32 %v687
        %v689 = vextract.high.u32 %v687
        %v690 = vmul.u32 %v683, %v674
        %v691 = vadd.s32 %v686, %v688
        %vm692 = vc.u32 %v686, %v688
        %v693 = vadd.s32 %v689, 1
        %v694 = vsel %vm692, %v693, %v689
        %v695 = vadd.s32 %v690, %v694
        %v696 = vadd.s32 %v695, 536870912
        %v697 = vshrl.u32 %v696, 30
        %v698 = vshll.u32 %v697, 30
        %v699 = vsub.s32 %v695, %v698
        %vm700 = vcmp.lt.s32.totalorder %v699, 0
        %v701 = vsub.s32 0, %v699
        %v702 = vsel %vm700, %v701, %v699
        %v703 = vclz %v702
        %v704 = vsub.s32 %v703, 2
        %vm705 = vcmp.gt.s32.totalorder 0, %v704
        %v706 = vsel %vm705, 0, %v704
        %v707 = vsub.s32 32, %v706
        %v708 = vshll.u32 %v699, %v706
        %v709 = vshrl.u32 %v691, %v707
        %v710 = vor.u32 %v708, %v709
        %v711 = vsub.s32 4294967266, %v706
        %v712 = vadd.s32 %v711, 127
        %v713 = vshll.u32 %v712, 23
        %v714 = vor.u32 4788187, %v713
        %v715 = vand.u32 2147483647, %v714
        %v717 = vcvt.s32.f32 %v710
        %v718 = vmul.f32 %v717, %v715
        %v719 = vxor.u32 %v718, 2147483648
        %v720 = vsel %vm637, %v719, %v718
        %v721 = vsub.s32 4, %v697
        %v722 = vsel %vm637, %v721, %v697
        %v723 = vsel %vm636, %v215, %v720
        %v724 = vsel %vm636, 0, %v722
        %v725 = vcosq.f32.pop %v723
        %v726 = vsinq.f32.pop %v723
        %vm727 = vweird.f32 %v215
        %v728 = vadd.s32 %v724, 3
        %v729 = vand.u32 %v728, 3
        %vm730 = vcmp.lt.s32.totalorder %v729, 2
        %vm731 = vcmp.eq.s32.totalorder %v729, 0
        %v732 = vxor.u32 %v726, 2147483648
        %v733 = vsel %vm731, %v725, %v732
        %vm734 = vcmp.eq.s32.totalorder %v729, 2
        %v735 = vxor.u32 %v725, 2147483648
        %v736 = vsel %vm734, %v735, %v726
        %v737 = vsel %vm730, %v733, %v736
        %v738 = vsel %vm727, nan, %v737
        %v739 = vand.u32 2147483647, %v216
        %vm740 = vcmp.le.f32.partialorder %v739, 0.7853982
        %vm741 = vcmp.lt.s32.totalorder %v216, 0
        %v742 = vand.u32 %v216, 2139095040
        %v743 = vshrl.u32 %v742, 23
        %v744 = vsub.s32 %v743, 127
        %v745 = vand.u32 2147483647, %v216
        %v746 = vand.u32 %v745, 8388607
        %v747 = vor.u32 %v746, 8388608
        %v748 = vsub.s32 0, %v747
        %v749 = vadd.s32 %v744, 1
        %vm750 = vcmp.gt.s32.totalorder %v749, 0
        %v751 = vsel %vm750, %v749, 0
        %v752 = vshrl.u32 %v751, 5
        %v753 = vand.u32 %v751, 31
        %v754 = vsub.s32 32, %v753
        %v755 = vshrl.u32 683565275, %v754
        %v756 = vshll.u32 683565275, %v753
        %v757 = vshrl.u32 2475754826, %v754
        %v758 = vor.u32 %v756, %v757
        %v759 = vshll.u32 2475754826, %v753
        %v760 = vshrl.u32 2131351028, %v754
        %v761 = vor.u32 %v759, %v760
        %v762 = vshll.u32 2131351028, %v753
        %v763 = vshrl.u32 2102212464, %v754
        %v764 = vor.u32 %v762, %v763
        %v765 = vshll.u32 2102212464, %v753
        %v766 = vshrl.u32 920167782, %v754
        %v767 = vor.u32 %v765, %v766
        %v768 = vshll.u32 920167782, %v753
        %v769 = vshrl.u32 1326507024, %v754
        %v770 = vor.u32 %v768, %v769
        %vm771 = vcmp.lt.s32.totalorder %v752, 1
        %vm772 = vcmp.lt.s32.totalorder %v752, 2
        %vm773 = vcmp.lt.s32.totalorder %v752, 3
        %vm774 = vcmp.lt.s32.totalorder %v752, 4
        %v775 = vsel %vm771, %v755, %v758
        %v776 = vsel %vm774, %v764, 2102212464
        %v777 = vsel %vm773, %v761, %v776
        %v778 = vsel %vm772, %v775, %v777
        %v779 = vsel %vm771, %v758, %v761
        %v780 = vsel %vm774, %v767, 920167782
        %v781 = vsel %vm773, %v764, %v780
        %v782 = vsel %vm772, %v779, %v781
        %v783 = vsel %vm771, %v761, %v764
        %v784 = vsel %vm774, %v770, 1326507024
        %v785 = vsel %vm773, %v767, %v784
        %v786 = vsel %vm772, %v783, %v785
        %v787 = vshll.u32 %v747, 8
        %v788 = vmul.u32.u64.compose %v787, %v786
        %v789 = vextract.low.u32 %v788
        %v790 = vextract.high.u32 %v788
        %v791 = vmul.u32.u64.compose %v787, %v782
        %v792 = vextract.low.u32 %v791
        %v793 = vextract.high.u32 %v791
        %v794 = vmul.u32 %v787, %v778
        %v795 = vadd.s32 %v790, %v792
        %vm796 = vc.u32 %v790, %v792
        %v797 = vadd.s32 %v793, 1
        %v798 = vsel %vm796, %v797, %v793
        %v799 = vadd.s32 %v794, %v798
        %v800 = vadd.s32 %v799, 536870912
        %v801 = vshrl.u32 %v800, 30
        %v802 = vshll.u32 %v801, 30
        %v803 = vsub.s32 %v799, %v802
        %vm804 = vcmp.lt.s32.totalorder %v803, 0
        %v805 = vsub.s32 0, %v803
        %v806 = vsel %vm804, %v805, %v803
        %v807 = vclz %v806
        %v808 = vsub.s32 %v807, 2
        %vm809 = vcmp.gt.s32.totalorder 0, %v808
        %v810 = vsel %vm809, 0, %v808
        %v811 = vsub.s32 32, %v810
        %v812 = vshll.u32 %v803, %v810
        %v813 = vshrl.u32 %v795, %v811
        %v814 = vor.u32 %v812, %v813
        %v815 = vsub.s32 4294967266, %v810
        %v816 = vadd.s32 %v815, 127
        %v817 = vshll.u32 %v816, 23
        %v818 = vor.u32 4788187, %v817
        %v819 = vand.u32 2147483647, %v818
        %v821 = vcvt.s32.f32 %v814
        %v822 = vmul.f32 %v821, %v819
        %v823 = vxor.u32 %v822, 2147483648
        %v824 = vsel %vm741, %v823, %v822
        %v825 = vsub.s32 4, %v801
        %v826 = vsel %vm741, %v825, %v801
        %v827 = vsel %vm740, %v216, %v824
        %v828 = vsel %vm740, 0, %v826
        %v829 = vcosq.f32.pop %v827
        %v830 = vsinq.f32.pop %v827
        %vm831 = vweird.f32 %v216
        %v832 = vadd.s32 %v828, 3
        %v833 = vand.u32 %v832, 3
        %vm834 = vcmp.lt.s32.totalorder %v833, 2
        %vm835 = vcmp.eq.s32.totalorder %v833, 0
        %v836 = vxor.u32 %v830, 2147483648
        %v837 = vsel %vm835, %v829, %v836
        %vm838 = vcmp.eq.s32.totalorder %v833, 2
        %v839 = vxor.u32 %v829, 2147483648
        %v840 = vsel %vm838, %v839, %v830
        %v841 = vsel %vm834, %v837, %v840
        %v842 = vsel %vm831, nan, %v841
        %v843 = vand.u32 2147483647, %v217
        %vm844 = vcmp.le.f32.partialorder %v843, 0.7853982
        %vm845 = vcmp.lt.s32.totalorder %v217, 0
        %v846 = vand.u32 %v217, 2139095040
        %v847 = vshrl.u32 %v846, 23
        %v848 = vsub.s32 %v847, 127
        %v849 = vand.u32 2147483647, %v217
        %v850 = vand.u32 %v849, 8388607
        %v851 = vor.u32 %v850, 8388608
        %v852 = vsub.s32 0, %v851
        %v853 = vadd.s32 %v848, 1
        %vm854 = vcmp.gt.s32.totalorder %v853, 0
        %v855 = vsel %vm854, %v853, 0
        %v856 = vshrl.u32 %v855, 5
        %v857 = vand.u32 %v855, 31
        %v858 = vsub.s32 32, %v857
        %v859 = vshrl.u32 683565275, %v858
        %v860 = vshll.u32 683565275, %v857
        %v861 = vshrl.u32 2475754826, %v858
        %v862 = vor.u32 %v860, %v861
        %v863 = vshll.u32 2475754826, %v857
        %v864 = vshrl.u32 2131351028, %v858
        %v865 = vor.u32 %v863, %v864
        %v866 = vshll.u32 2131351028, %v857
        %v867 = vshrl.u32 2102212464, %v858
        %v868 = vor.u32 %v866, %v867
        %v869 = vshll.u32 2102212464, %v857
        %v870 = vshrl.u32 920167782, %v858
        %v871 = vor.u32 %v869, %v870
        %v872 = vshll.u32 920167782, %v857
        %v873 = vshrl.u32 1326507024, %v858
        %v874 = vor.u32 %v872, %v873
        %vm875 = vcmp.lt.s32.totalorder %v856, 1
        %vm876 = vcmp.lt.s32.totalorder %v856, 2
        %vm877 = vcmp.lt.s32.totalorder %v856, 3
        %vm878 = vcmp.lt.s32.totalorder %v856, 4
        %v879 = vsel %vm875, %v859, %v862
        %v880 = vsel %vm878, %v868, 2102212464
        %v881 = vsel %vm877, %v865, %v880
        %v882 = vsel %vm876, %v879, %v881
        %v883 = vsel %vm875, %v862, %v865
        %v884 = vsel %vm878, %v871, 920167782
        %v885 = vsel %vm877, %v868, %v884
        %v886 = vsel %vm876, %v883, %v885
        %v887 = vsel %vm875, %v865, %v868
        %v888 = vsel %vm878, %v874, 1326507024
        %v889 = vsel %vm877, %v871, %v888
        %v890 = vsel %vm876, %v887, %v889
        %v891 = vshll.u32 %v851, 8
        %v892 = vmul.u32.u64.compose %v891, %v890
        %v893 = vextract.low.u32 %v892
        %v894 = vextract.high.u32 %v892
        %v895 = vmul.u32.u64.compose %v891, %v886
        %v896 = vextract.low.u32 %v895
        %v897 = vextract.high.u32 %v895
        %v898 = vmul.u32 %v891, %v882
        %v899 = vadd.s32 %v894, %v896
        %vm900 = vc.u32 %v894, %v896
        %v901 = vadd.s32 %v897, 1
        %v902 = vsel %vm900, %v901, %v897
        %v903 = vadd.s32 %v898, %v902
        %v904 = vadd.s32 %v903, 536870912
        %v905 = vshrl.u32 %v904, 30
        %v906 = vshll.u32 %v905, 30
        %v907 = vsub.s32 %v903, %v906
        %vm908 = vcmp.lt.s32.totalorder %v907, 0
        %v909 = vsub.s32 0, %v907
        %v910 = vsel %vm908, %v909, %v907
        %v911 = vclz %v910
        %v912 = vsub.s32 %v911, 2
        %vm913 = vcmp.gt.s32.totalorder 0, %v912
        %v914 = vsel %vm913, 0, %v912
        %v915 = vsub.s32 32, %v914
        %v916 = vshll.u32 %v907, %v914
        %v917 = vshrl.u32 %v899, %v915
        %v918 = vor.u32 %v916, %v917
        %v919 = vsub.s32 4294967266, %v914
        %v920 = vadd.s32 %v919, 127
        %v921 = vshll.u32 %v920, 23
        %v922 = vor.u32 4788187, %v921
        %v923 = vand.u32 2147483647, %v922
        %v925 = vcvt.s32.f32 %v918
        %v926 = vmul.f32 %v925, %v923
        %v927 = vxor.u32 %v926, 2147483648
        %v928 = vsel %vm845, %v927, %v926
        %v929 = vsub.s32 4, %v905
        %v930 = vsel %vm845, %v929, %v905
        %v931 = vsel %vm844, %v217, %v928
        %v932 = vsel %vm844, 0, %v930
        %v933 = vcosq.f32.pop %v931
        %v934 = vsinq.f32.pop %v931
        %vm935 = vweird.f32 %v217
        %v936 = vadd.s32 %v932, 3
        %v937 = vand.u32 %v936, 3
        %vm938 = vcmp.lt.s32.totalorder %v937, 2
        %vm939 = vcmp.eq.s32.totalorder %v937, 0
        %v940 = vxor.u32 %v934, 2147483648
        %v941 = vsel %vm939, %v933, %v940
        %vm942 = vcmp.eq.s32.totalorder %v937, 2
        %v943 = vxor.u32 %v933, 2147483648
        %v944 = vsel %vm942, %v943, %v934
        %v945 = vsel %vm938, %v941, %v944
        %v946 = vsel %vm935, nan, %v945
        %v947 = vand.u32 2147483647, %v218
        %vm948 = vcmp.le.f32.partialorder %v947, 0.7853982
        %vm949 = vcmp.lt.s32.totalorder %v218, 0
        %v950 = vand.u32 %v218, 2139095040
        %v951 = vshrl.u32 %v950, 23
        %v952 = vsub.s32 %v951, 127
        %v953 = vand.u32 2147483647, %v218
        %v954 = vand.u32 %v953, 8388607
        %v955 = vor.u32 %v954, 8388608
        %v956 = vsub.s32 0, %v955
        %v957 = vadd.s32 %v952, 1
        %vm958 = vcmp.gt.s32.totalorder %v957, 0
        %v959 = vsel %vm958, %v957, 0
        %v960 = vshrl.u32 %v959, 5
        %v961 = vand.u32 %v959, 31
        %v962 = vsub.s32 32, %v961
        %v963 = vshrl.u32 683565275, %v962
        %v964 = vshll.u32 683565275, %v961
        %v965 = vshrl.u32 2475754826, %v962
        %v966 = vor.u32 %v964, %v965
        %v967 = vshll.u32 2475754826, %v961
        %v968 = vshrl.u32 2131351028, %v962
        %v969 = vor.u32 %v967, %v968
        %v970 = vshll.u32 2131351028, %v961
        %v971 = vshrl.u32 2102212464, %v962
        %v972 = vor.u32 %v970, %v971
        %v973 = vshll.u32 2102212464, %v961
        %v974 = vshrl.u32 920167782, %v962
        %v975 = vor.u32 %v973, %v974
        %v976 = vshll.u32 920167782, %v961
        %v977 = vshrl.u32 1326507024, %v962
        %v978 = vor.u32 %v976, %v977
        %vm979 = vcmp.lt.s32.totalorder %v960, 1
        %vm980 = vcmp.lt.s32.totalorder %v960, 2
        %vm981 = vcmp.lt.s32.totalorder %v960, 3
        %vm982 = vcmp.lt.s32.totalorder %v960, 4
        %v983 = vsel %vm979, %v963, %v966
        %v984 = vsel %vm982, %v972, 2102212464
        %v985 = vsel %vm981, %v969, %v984
        %v986 = vsel %vm980, %v983, %v985
        %v987 = vsel %vm979, %v966, %v969
        %v988 = vsel %vm982, %v975, 920167782
        %v989 = vsel %vm981, %v972, %v988
        %v990 = vsel %vm980, %v987, %v989
        %v991 = vsel %vm979, %v969, %v972
        %v992 = vsel %vm982, %v978, 1326507024
        %v993 = vsel %vm981, %v975, %v992
        %v994 = vsel %vm980, %v991, %v993
        %v995 = vshll.u32 %v955, 8
        %v996 = vmul.u32.u64.compose %v995, %v994
        %v997 = vextract.low.u32 %v996
        %v998 = vextract.high.u32 %v996
        %v999 = vmul.u32.u64.compose %v995, %v990
        %v1000 = vextract.low.u32 %v999
        %v1001 = vextract.high.u32 %v999
        %v1002 = vmul.u32 %v995, %v986
        %v1003 = vadd.s32 %v998, %v1000
        %vm1004 = vc.u32 %v998, %v1000
        %v1005 = vadd.s32 %v1001, 1
        %v1006 = vsel %vm1004, %v1005, %v1001
        %v1007 = vadd.s32 %v1002, %v1006
        %v1008 = vadd.s32 %v1007, 536870912
        %v1009 = vshrl.u32 %v1008, 30
        %v1010 = vshll.u32 %v1009, 30
        %v1011 = vsub.s32 %v1007, %v1010
        %vm1012 = vcmp.lt.s32.totalorder %v1011, 0
        %v1013 = vsub.s32 0, %v1011
        %v1014 = vsel %vm1012, %v1013, %v1011
        %v1015 = vclz %v1014
        %v1016 = vsub.s32 %v1015, 2
        %vm1017 = vcmp.gt.s32.totalorder 0, %v1016
        %v1018 = vsel %vm1017, 0, %v1016
        %v1019 = vsub.s32 32, %v1018
        %v1020 = vshll.u32 %v1011, %v1018
        %v1021 = vshrl.u32 %v1003, %v1019
        %v1022 = vor.u32 %v1020, %v1021
        %v1023 = vsub.s32 4294967266, %v1018
        %v1024 = vadd.s32 %v1023, 127
        %v1025 = vshll.u32 %v1024, 23
        %v1026 = vor.u32 4788187, %v1025
        %v1027 = vand.u32 2147483647, %v1026
        %v1029 = vcvt.s32.f32 %v1022
        %v1030 = vmul.f32 %v1029, %v1027
        %v1031 = vxor.u32 %v1030, 2147483648
        %v1032 = vsel %vm949, %v1031, %v1030
        %v1033 = vsub.s32 4, %v1009
        %v1034 = vsel %vm949, %v1033, %v1009
        %v1035 = vsel %vm948, %v218, %v1032
        %v1036 = vsel %vm948, 0, %v1034
        %v1037 = vcosq.f32.pop %v1035
        %v1038 = vsinq.f32.pop %v1035
        %vm1039 = vweird.f32 %v218
        %v1040 = vadd.s32 %v1036, 3
        %v1041 = vand.u32 %v1040, 3
        %vm1042 = vcmp.lt.s32.totalorder %v1041, 2
        %vm1043 = vcmp.eq.s32.totalorder %v1041, 0
        %v1044 = vxor.u32 %v1038, 2147483648
        %v1045 = vsel %vm1043, %v1037, %v1044
        %vm1046 = vcmp.eq.s32.totalorder %v1041, 2
        %v1047 = vxor.u32 %v1037, 2147483648
        %v1048 = vsel %vm1046, %v1047, %v1038
        %v1049 = vsel %vm1042, %v1045, %v1048
        %v1050 = vsel %vm1039, nan, %v1049
        %1051 = vst [vmem:[%s137] sm:$0xff] %v322
        %1052 = vst [vmem:[%s137 + $0x8] sm:$0xff] %v426
        %1053 = vst [vmem:[%s137 + $0x10] sm:$0xff] %v530
        %1054 = vst [vmem:[%s137 + $0x18] sm:$0xff] %v634
        %1055 = vst [vmem:[%s137 + $0x20] sm:$0xff] %v738
        %1056 = vst [vmem:[%s137 + $0x28] sm:$0xff] %v842
        %1057 = vst [vmem:[%s137 + $0x30] sm:$0xff] %v946
        %1058 = vst [vmem:[%s137 + $0x38] sm:$0xff] %v1050
        %s1059 = sand.u32 %s71, 1
        %s1060 = scalar_lea.sflag [#allocation3], %s1059
        %s1061 = sand.u32 %s71, 1
        %s1062 = smul.addr %s1061, 64
        %s1063 = scalar_lea.vmem [#allocation2], %s1062
        // Predicated region
        $region29: #{tpu_custom_call.1} parent=27 // pred_check
          %p1064 = pneg %p81
        $region30: #{tpu_custom_call.1} parent=27 // pred_check_branch
          %1066 = sbr.rel (%p1064) target = $region32
        $region31: #{tpu_custom_call.1} parent=27 // pred_region
          %s1067 = smul.u32 8, %s16
          %s1069 = ssub.s32 1024, 1024
          %1070 = vsyncadd %s1060, %s1069
          %s1071 = smul.addr %s1067, 128
          %s1072 = scalar_lea.hbm %s2, %s1071
          %s1073 = sshll.u32 %s1063, 4
          %s1074 = int_to_ptr.vmem [resolvable:$true] %s1073
          %1079 = dma.vmem_to_hbm [thread:$0]  %s1074, 1024, %s1072, %s1060, 128, 128, 8
        $region32: #{tpu_custom_call.1} parent=27 // pred_fallthru
          _
      $region28: #{tpu_custom_call.1} parent=5 // pred_fallthru
        _
      %p1080 = scmp.le.s32.totalorder 2, %s11
      // Predicated region
      $region33: #{tpu_custom_call.1} parent=5 // pred_check
        %p1081 = pneg %p1080
      $region34: #{tpu_custom_call.1} parent=5 // pred_check_branch
        %1083 = sbr.rel (%p1081) target = $region36
      $region35: #{tpu_custom_call.1} parent=5 // pred_region
        %s1084 = ssub.s32 %s11, 2
        // Predicated region
        $region37: #{tpu_custom_call.1} parent=35 // pred_check
          %p1085 = pneg %p87
        $region38: #{tpu_custom_call.1} parent=35 // pred_check_branch
          %1087 = sbr.rel (%p1085) target = $region40
        $region39: #{tpu_custom_call.1} parent=35 // pred_region
          %s1088 = sand.u32 %s72, 1
          %s1089 = scalar_lea.sflag [#allocation3], %s1088
          %s1090 = sand.u32 %s72, 1
          %s1091 = smul.addr %s1090, 64
          %s1092 = scalar_lea.vmem [#allocation2], %s1091
          %1093 = dma.done %s1089, 1024
        $region40: #{tpu_custom_call.1} parent=35 // pred_fallthru
          _
      $region36: #{tpu_custom_call.1} parent=5 // pred_fallthru
        _
    $region6: #{tpu_custom_call.1} parent=1 // loop_footer
      %s15 = sadd.s32 1, %s11
    $region7: #{tpu_custom_call.1} parent=1 // loop_footer_branch
      %10 = sbr.rel target = $region3
    $region8: #{tpu_custom_call.1} parent=1 // loop_exit
      _
    %1094 = vsyncpa [#allocation3], 1
    %s1095 = scalar_lea.sflag [#allocation3], 1
    %1096 = vsyncpa %s1095, 1

</llo_original>
